<compile_context>
chip_gen: v5e
topology: v5e:2x2
jax: 0.10.0
libtpu: 0.0.40
codegen_flags: <defaults>
</compile_context>

<pallas_src>
import functools

import jax
import jax.numpy as jnp
from jax.experimental import pallas as pl
from jax.experimental.pallas import tpu as pltpu


def _round_up(n: int, m: int) -> int:
    return ((n + m - 1) // m) * m


def _make_mlp_kernel(use_vpu_layer1: bool):
    def kernel(x_ref, w1_ref, b1_ref, w2_ref, b2_ref, o_ref):
        x = x_ref[...]          # (TB, F)  f32
        w1 = w1_ref[...]        # (F, H)   f32

        if use_vpu_layer1:
            # Tiny contraction dim: F broadcast-FMAs on the VPU; the MXU is
            # reserved for the H-contraction of layer 2.
            F = x.shape[1]
            h = x[:, 0:1] * w1[0:1, :] + b1_ref[...]          # (TB, H)
            for k in range(1, F):
                h = h + x[:, k:k + 1] * w1[k:k + 1, :]
        else:
            h = jnp.dot(x, w1, preferred_element_type=jnp.float32) + b1_ref[...]

        h = jnp.maximum(h, 0.0)                                # ReLU on VPU

        # Output layer: (TB, H) @ (H, O) on the MXU; store exactly (TB, O),
        # no lane padding of the HBM output.
        y = jnp.dot(h, w2_ref[...], preferred_element_type=jnp.float32)
        o_ref[...] = (y + b2_ref[...]).astype(o_ref.dtype)

    return kernel


def _pick_tile(batch: int, block_b: int) -> int:
    """Batch tile: multiple of 8 sublanes, capped by block_b. When the grid has
    more than one step, nudge to an even step count so ("parallel",) semantics
    balance both TensorCores on v7x."""
    tb = max(8, min(max(8, (block_b // 8) * 8), _round_up(batch, 8)))
    steps = pl.cdiv(batch, tb)
    if steps > 1 and steps % 2 == 1:
        tb = max(8, _round_up(pl.cdiv(batch, steps + 1), 8))
    return tb


@functools.partial(jax.jit, static_argnames=("block_b",))
def net_forward(x, w1, b1, w2, b2, *, block_b=8192):
    """2-layer MLP forward pass as a single fused Pallas kernel.

    x  : (B, n_feature)            float32
    w1 : (n_feature, n_hidden)     (transposed vs. PyTorch's (out, in) layout)
    b1 : (n_hidden,)
    w2 : (n_hidden, n_output)
    b2 : (n_output,)
    returns (B, n_output) float32
    """
    B, F = x.shape
    H = w1.shape[1]
    O = w2.shape[1]

    TB = _pick_tile(B, block_b)
    grid = (pl.cdiv(B, TB),)

    b1_2d = b1.reshape(1, H)
    b2_2d = b2.reshape(1, O)

    kernel = _make_mlp_kernel(use_vpu_layer1=(F <= 8))

    cost = pl.CostEstimate(
        flops=2 * B * (F * H + H * O),
        transcendentals=0,
        bytes_accessed=4 * (B * F + F * H + H + H * O + O + B * O),
    )

    return pl.pallas_call(
        kernel,
        out_shape=jax.ShapeDtypeStruct((B, O), jnp.float32),
        grid_spec=pl.GridSpec(
            grid=grid,
            in_specs=[
                pl.BlockSpec((TB, F), lambda i: (i, 0)),   # x: tiled over batch
                pl.BlockSpec((F, H), lambda i: (0, 0)),    # w1: resident
                pl.BlockSpec((1, H), lambda i: (0, 0)),    # b1: resident
                pl.BlockSpec((H, O), lambda i: (0, 0)),    # w2: resident
                pl.BlockSpec((1, O), lambda i: (0, 0)),    # b2: resident
            ],
            out_specs=pl.BlockSpec((TB, O), lambda i: (i, 0)),
        ),
        compiler_params=pltpu.CompilerParams(
            dimension_semantics=("parallel",),
        ),
        cost_estimate=cost,
    )(x, w1, b1_2d, w2, b2_2d)


if __name__ == "__main__":
    # Shapes implied by the classification example: small feature / output
    # dims, modest hidden width.
    batch, n_feature, n_hidden, n_output = 8, 4, 32, 3

    key = jax.random.PRNGKey(0)
    kx, kw1, kb1, kw2, kb2 = jax.random.split(key, 5)

    x = jax.random.normal(kx, (batch, n_feature), dtype=jnp.float32)

    # PyTorch Linear stores weight as (out, in); generate directly in the
    # (in, out) layout the kernel consumes.
    w1 = jax.random.normal(kw1, (n_feature, n_hidden), dtype=jnp.float32) * 0.1
    b1 = jax.random.normal(kb1, (n_hidden,), dtype=jnp.float32) * 0.1
    w2 = jax.random.normal(kw2, (n_hidden, n_output), dtype=jnp.float32) * 0.1
    b2 = jax.random.normal(kb2, (n_output,), dtype=jnp.float32) * 0.1

    out = net_forward(x, w1, b1, w2, b2)
    jax.block_until_ready(out)

    # Reference check against plain JAX (same math as the PyTorch forward).
    ref = jnp.maximum(x @ w1 + b1, 0.0) @ w2 + b2
    assert out.shape == (batch, n_output)
    assert jnp.allclose(out, ref, atol=1e-5, rtol=1e-5)

    # Exercise the multi-step / ragged-tail path (B not a multiple of the tile
    # or of 8): partial trailing block must be masked correctly on writeback.
    big_B = 2500
    xb = jax.random.normal(kx, (big_B, n_feature), dtype=jnp.float32)
    out_big = net_forward(xb, w1, b1, w2, b2, block_b=1024)
    jax.block_until_ready(out_big)
    ref_big = jnp.maximum(xb @ w1 + b1, 0.0) @ w2 + b2
    assert out_big.shape == (big_B, n_output)
    assert jnp.allclose(out_big, ref_big, atol=1e-5, rtol=1e-5)

    print("KERNEL_OK")
</pallas_src>

<mosaic_0001>
module attributes {stable_mosaic.version = 11 : i64} {
  func.func @kernel(%arg0: i32, %arg1: memref<8x4xf32, #tpu.memory_space<vmem>>, %arg2: memref<4x32xf32, #tpu.memory_space<vmem>>, %arg3: memref<1x32xf32, #tpu.memory_space<vmem>>, %arg4: memref<32x3xf32, #tpu.memory_space<vmem>>, %arg5: memref<1x3xf32, #tpu.memory_space<vmem>>, %arg6: memref<8x3xf32, #tpu.memory_space<vmem>>) attributes {dimension_semantics = [#tpu.dimension_semantics<parallel>], iteration_bounds = array<i64: 1>, scalar_prefetch = 0 : i64, scratch_operands = 0 : i64, tpu.core_type = #tpu.core_type<tc>, window_params = [{transform_indices = @transform_0, window_bounds = array<i64: 8, 4>}, {pipeline_mode = #tpu.pipeline_mode<synchronous>, transform_indices = @transform_1, window_bounds = array<i64: 4, 32>}, {pipeline_mode = #tpu.pipeline_mode<synchronous>, transform_indices = @transform_2, window_bounds = array<i64: 1, 32>}, {pipeline_mode = #tpu.pipeline_mode<synchronous>, transform_indices = @transform_3, window_bounds = array<i64: 32, 3>}, {pipeline_mode = #tpu.pipeline_mode<synchronous>, transform_indices = @transform_4, window_bounds = array<i64: 1, 3>}, {transform_indices = @transform_5, window_bounds = array<i64: 8, 3>}]} {
    %c0 = arith.constant 0 : index
    %c0_0 = arith.constant 0 : index
    %0 = vector.load %arg1[%c0, %c0_0] : memref<8x4xf32, #tpu.memory_space<vmem>>, vector<8x4xf32>
    %c0_1 = arith.constant 0 : index
    %c0_2 = arith.constant 0 : index
    %1 = vector.load %arg2[%c0_1, %c0_2] : memref<4x32xf32, #tpu.memory_space<vmem>>, vector<4x32xf32>
    %2 = vector.extract_strided_slice %0 {offsets = [0, 0], sizes = [8, 1], strides = [1, 1]} : vector<8x4xf32> to vector<8x1xf32>
    %3 = vector.extract_strided_slice %1 {offsets = [0, 0], sizes = [1, 32], strides = [1, 1]} : vector<4x32xf32> to vector<1x32xf32>
    %4 = vector.broadcast %2 : vector<8x1xf32> to vector<8x32xf32>
    %5 = vector.broadcast %3 : vector<1x32xf32> to vector<8x32xf32>
    %6 = arith.mulf %4, %5 : vector<8x32xf32>
    %c0_3 = arith.constant 0 : index
    %c0_4 = arith.constant 0 : index
    %7 = vector.load %arg3[%c0_3, %c0_4] : memref<1x32xf32, #tpu.memory_space<vmem>>, vector<1x32xf32>
    %8 = vector.broadcast %7 : vector<1x32xf32> to vector<8x32xf32>
    %9 = arith.addf %6, %8 : vector<8x32xf32>
    %10 = vector.extract_strided_slice %0 {offsets = [0, 1], sizes = [8, 1], strides = [1, 1]} : vector<8x4xf32> to vector<8x1xf32>
    %11 = vector.extract_strided_slice %1 {offsets = [1, 0], sizes = [1, 32], strides = [1, 1]} : vector<4x32xf32> to vector<1x32xf32>
    %12 = vector.broadcast %10 : vector<8x1xf32> to vector<8x32xf32>
    %13 = vector.broadcast %11 : vector<1x32xf32> to vector<8x32xf32>
    %14 = arith.mulf %12, %13 : vector<8x32xf32>
    %15 = arith.addf %9, %14 : vector<8x32xf32>
    %16 = vector.extract_strided_slice %0 {offsets = [0, 2], sizes = [8, 1], strides = [1, 1]} : vector<8x4xf32> to vector<8x1xf32>
    %17 = vector.extract_strided_slice %1 {offsets = [2, 0], sizes = [1, 32], strides = [1, 1]} : vector<4x32xf32> to vector<1x32xf32>
    %18 = vector.broadcast %16 : vector<8x1xf32> to vector<8x32xf32>
    %19 = vector.broadcast %17 : vector<1x32xf32> to vector<8x32xf32>
    %20 = arith.mulf %18, %19 : vector<8x32xf32>
    %21 = arith.addf %15, %20 : vector<8x32xf32>
    %22 = vector.extract_strided_slice %0 {offsets = [0, 3], sizes = [8, 1], strides = [1, 1]} : vector<8x4xf32> to vector<8x1xf32>
    %23 = vector.extract_strided_slice %1 {offsets = [3, 0], sizes = [1, 32], strides = [1, 1]} : vector<4x32xf32> to vector<1x32xf32>
    %24 = vector.broadcast %22 : vector<8x1xf32> to vector<8x32xf32>
    %25 = vector.broadcast %23 : vector<1x32xf32> to vector<8x32xf32>
    %26 = arith.mulf %24, %25 : vector<8x32xf32>
    %27 = arith.addf %21, %26 : vector<8x32xf32>
    %cst = arith.constant 0.000000e+00 : f32
    %28 = vector.broadcast %cst : f32 to vector<8x32xf32>
    %29 = arith.maximumf %27, %28 : vector<8x32xf32>
    %c0_5 = arith.constant 0 : index
    %c0_6 = arith.constant 0 : index
    %30 = vector.load %arg4[%c0_5, %c0_6] : memref<32x3xf32, #tpu.memory_space<vmem>>, vector<32x3xf32>
    %cst_7 = arith.constant dense<0.000000e+00> : vector<8x3xf32>
    %31 = tpu.matmul %29, %30, %cst_7 {dimension_numbers = #tpu.dot_dimension_numbers<[1], [0], [0], [1], [0, 0, 1, 1], [], []>} : vector<8x32xf32>, vector<32x3xf32>, vector<8x3xf32> -> vector<8x3xf32>
    %c0_8 = arith.constant 0 : index
    %c0_9 = arith.constant 0 : index
    %32 = vector.load %arg5[%c0_8, %c0_9] : memref<1x3xf32, #tpu.memory_space<vmem>>, vector<1x3xf32>
    %33 = vector.broadcast %32 : vector<1x3xf32> to vector<8x3xf32>
    %34 = arith.addf %31, %33 : vector<8x3xf32>
    %c0_10 = arith.constant 0 : index
    %c0_11 = arith.constant 0 : index
    %35 = vector.load %arg6[%c0_10, %c0_11] : memref<8x3xf32, #tpu.memory_space<vmem>>, vector<8x3xf32>
    tpu.vector_store %arg6[%c0_10, %c0_11], %34 {strides = array<i32>} : memref<8x3xf32, #tpu.memory_space<vmem>>, vector<8x3xf32>,
    return
  }
  func.func @transform_0(%arg0: i32) -> (i32, i32) {
    %c0_i32 = arith.constant 0 : i32
    %c0_i32_0 = arith.constant 0 : i32
    return %arg0, %c0_i32 : i32, i32
  }
  func.func @transform_1(%arg0: i32) -> (i32, i32) {
    %c0_i32 = arith.constant 0 : i32
    %c0_i32_0 = arith.constant 0 : i32
    %c0_i32_1 = arith.constant 0 : i32
    return %c0_i32, %c0_i32_0 : i32, i32
  }
  func.func @transform_2(%arg0: i32) -> (i32, i32) {
    %c0_i32 = arith.constant 0 : i32
    %c0_i32_0 = arith.constant 0 : i32
    %c0_i32_1 = arith.constant 0 : i32
    return %c0_i32, %c0_i32_0 : i32, i32
  }
  func.func @transform_3(%arg0: i32) -> (i32, i32) {
    %c0_i32 = arith.constant 0 : i32
    %c0_i32_0 = arith.constant 0 : i32
    %c0_i32_1 = arith.constant 0 : i32
    return %c0_i32, %c0_i32_0 : i32, i32
  }
  func.func @transform_4(%arg0: i32) -> (i32, i32) {
    %c0_i32 = arith.constant 0 : i32
    %c0_i32_0 = arith.constant 0 : i32
    %c0_i32_1 = arith.constant 0 : i32
    return %c0_i32, %c0_i32_0 : i32, i32
  }
  func.func @transform_5(%arg0: i32) -> (i32, i32) {
    %c0_i32 = arith.constant 0 : i32
    %c0_i32_0 = arith.constant 0 : i32
    return %arg0, %c0_i32 : i32, i32
  }
}

</mosaic_0001>

<llo_original>
// kernel: net_forward.1
$region0: #{net_forward.1}
  #allocation0 [shape = 'u32[]', space=smem, size = 0x4, offset = 0x4, fixed_abs, tag = 'smem constant byte address 0x4 - core index']
  #allocation1 [shape = 'u32[72,128]{1,0:T(1,128)}', space=vmem, size = 0x9000, scoped, tag = 'internal scratch']
  %s0 = inlined_call_operand.vmem [shape: f32[8,4], index: 0, kind: input, shape index: {}]
  %s1 = inlined_call_operand.vmem [shape: f32[4,32], index: 1, kind: input, shape index: {}]
  %s2 = inlined_call_operand.vmem [shape: f32[1,32], index: 2, kind: input, shape index: {}]
  %s3 = inlined_call_operand.vmem [shape: f32[32,3], index: 3, kind: input, shape index: {}]
  %s4 = inlined_call_operand.vmem [shape: f32[1,3], index: 4, kind: input, shape index: {}]
  %s5 = inlined_call_operand.vmem [shape: f32[8,3], index: 5, kind: output, shape index: {}]
  %s6 = sld [smem:[#allocation0]]
  $region30: #{net_forward.1} parent=0
    _
  %s8 = ssub.s32 1, %s6
  %s9 = scalar_select 0, %s8, %s6
  // Predicated region
  $region2: #{net_forward.1} parent=0 // pred_check
    _
  $region3: #{net_forward.1} parent=0 // pred_check_branch
    %11 = sbr.rel (0) target = $region5
  $region4: #{net_forward.1} parent=0 // pred_region
    _
  $region5: #{net_forward.1} parent=0 // pred_fallthru
    _
  // Predicated region
  $region6: #{net_forward.1} parent=0 // pred_check
    _
  $region7: #{net_forward.1} parent=0 // pred_check_branch
    %13 = sbr.rel (0) target = $region9
  $region8: #{net_forward.1} parent=0 // pred_region
    _
  $region9: #{net_forward.1} parent=0 // pred_fallthru
    _
  // Predicated region
  $region10: #{net_forward.1} parent=0 // pred_check
    _
  $region11: #{net_forward.1} parent=0 // pred_check_branch
    %15 = sbr.rel (0) target = $region13
  $region12: #{net_forward.1} parent=0 // pred_region
    _
  $region13: #{net_forward.1} parent=0 // pred_fallthru
    _
  // Predicated region
  $region14: #{net_forward.1} parent=0 // pred_check
    _
  $region15: #{net_forward.1} parent=0 // pred_check_branch
    %17 = sbr.rel (0) target = $region17
  $region16: #{net_forward.1} parent=0 // pred_region
    _
  $region17: #{net_forward.1} parent=0 // pred_fallthru
    _
  // Predicated region
  $region18: #{net_forward.1} parent=0 // pred_check
    _
  $region19: #{net_forward.1} parent=0 // pred_check_branch
    %19 = sbr.rel (0) target = $region21
  $region20: #{net_forward.1} parent=0 // pred_region
    _
  $region21: #{net_forward.1} parent=0 // pred_fallthru
    _
  %v20 = vld [vmem:[%s0] sm:$0xff]
  %v21 = vld [vmem:[%s1] sm:$0xf]
  %23 = vset.pattern.permute.xlu0 0
  %24 = vperm.xlu0 %23, %v20
  %v25 = vpop.permute.xlu0 %24
  %v27 = vperm.slane %v21, 0
  %v28 = vmul.f32 %v25, %v27
  %v29 = vld [vmem:[%s2] sm:$0x1]
  %v31 = vperm.slane %v29, 0
  %v33 = vadd.f32 %v28, %v31
  %34 = vset.pattern.permute.xlu0 1
  %35 = vperm.xlu0 %34, %v20
  %v36 = vpop.permute.xlu0 %35
  %v38 = vperm.slane %v21, 1
  %v39 = vmul.f32 %v36, %v38
  %v40 = vadd.f32 %v33, %v39
  %41 = vset.pattern.permute.xlu0 2
  %42 = vperm.xlu0 %41, %v20
  %v43 = vpop.permute.xlu0 %42
  %v45 = vperm.slane %v21, 2
  %v46 = vmul.f32 %v43, %v45
  %v47 = vadd.f32 %v40, %v46
  %48 = vset.pattern.permute.xlu0 3
  %49 = vperm.xlu0 %48, %v20
  %v50 = vpop.permute.xlu0 %49
  %v52 = vperm.slane %v21, 3
  %v53 = vmul.f32 %v50, %v52
  %v54 = vadd.f32 %v47, %v53
  %v55 = vmax.f32 %v54, 0.0
  %v56 = vld [vmem:[%s3] sm:$0xff]
  %v57 = vld [vmem:[%s3 + $0x8] sm:$0xff]
  %v58 = vld [vmem:[%s3 + $0x10] sm:$0xff]
  %v59 = vld [vmem:[%s3 + $0x18] sm:$0xff]
  %v60 = vld [vmem:[%s4] sm:$0x1]
  %v62 = vperm.slane %v60, 0
  %vm64 = vcmask 261120
  %v66 = vsel %vm64, %v55, 0
  %68 = vmatpush.msra.mxu0 0.0
  %69 = vmatpush.msra.mxu0 0.0
  %70 = vmatpush.msra.mxu0 0.0
  %71 = vmatpush.msra.mxu0 0.0
  %72 = vmatpush.msra.mxu0 0.0
  %73 = vmatpush.msra.mxu0 0.0
  %74 = vmatpush.msra.mxu0 0.0
  %75 = vmatpush.msra.mxu0 0.0
  %76 = vmatpush.msra.mxu0 0.0
  %77 = vmatpush.msra.mxu0 0.0
  %78 = vmatpush.msra.mxu0 0.0
  %79 = vmatpush.msra.mxu0 0.0
  %80 = vmatpush.msra.mxu0 %v59
  %81 = vmatpush.msra.mxu0 %v58
  %82 = vmatpush.msra.mxu0 %v57
  %83 = vmatpush.msra.mxu0 %v56
  %84 = vmatmul.f32.gmra.mxu0 %v66
  %v85 = vpop.f32.mrf.mxu0
  %v86 = vadd.f32 %v62, %v85
  %87 = vdwg.mxu0
  %vm88 = vcmask 23552
  %89 = vst.msk [vmem:[%s5] sm:$0xff] %vm88, %v86
  // Predicated region
  $region22: #{net_forward.1} parent=0 // pred_check
    _
  $region23: #{net_forward.1} parent=0 // pred_check_branch
    %91 = sbr.rel (0) target = $region25
  $region24: #{net_forward.1} parent=0 // pred_region
    _
  $region25: #{net_forward.1} parent=0 // pred_fallthru
    _
  // Predicated region
  $region26: #{net_forward.1} parent=0 // pred_check
    _
  $region27: #{net_forward.1} parent=0 // pred_check_branch
    %93 = sbr.rel (0) target = $region29
  $region28: #{net_forward.1} parent=0 // pred_region
    _
  $region29: #{net_forward.1} parent=0 // pred_fallthru
    _

</llo_original>
